<compile_context>
chip_gen: v6e
topology: v6e:2x2x1
jax: 0.10.0
libtpu: 0.0.40
codegen_flags: <defaults>
</compile_context>

<pallas_src>
import jax
import jax.numpy as jnp
from jax.experimental import pallas as pl
from jax.experimental.pallas import tpu as pltpu

_VMEM_LIMIT_BYTES = 32 * 1024 * 1024  # explicit scoped VMEM limit, safe on v5e/v6e/v7x


def _mlp_kernel(x_ref, w1_ref, gamma_ref, beta_ref, w2_ref, b2_ref, o_ref):
    hs = pl.program_id(1)  # H-tile (reduction) axis; axis 0 is the parallel C split

    # ---- Linear 1 (bf16 MXU operands, f32 accumulation) ---------------------
    h = jnp.dot(x_ref[...], w1_ref[...],
                preferred_element_type=jnp.float32)                     # (N, tH) f32

    # ---- BatchNorm1d (training mode, biased var, eps=1e-5) + ReLU, fused ----
    # Two-pass centered variance: robust against mean >> std cancellation.
    n_inv = 1.0 / h.shape[0]
    mean = jnp.sum(h, axis=0, keepdims=True) * n_inv                    # (1, tH)
    hc = h - mean                                                       # (N, tH)
    var = jnp.sum(hc * hc, axis=0, keepdims=True) * n_inv               # (1, tH)
    scale = gamma_ref[...] * jax.lax.rsqrt(var + 1e-5)                  # EUP rsqrt
    h_act = jnp.maximum(hc * scale + beta_ref[...], 0.0)                # (N, tH) f32

    # ---- Linear 2: accumulate directly into the VMEM-resident output block --
    @pl.when(hs == 0)
    def _init():
        o_ref[...] = jnp.broadcast_to(b2_ref[...], o_ref.shape)

    o_ref[...] += jnp.dot(h_act.astype(jnp.bfloat16), w2_ref[...],
                          preferred_element_type=jnp.float32)


def _vmem_est_bytes(N, D, tC, tH):
    # Double-buffered blocks + in-body f32 temporaries (h / centered h / activated h).
    return (2 * N * D * 2          # x block (bf16)
            + 2 * N * tC * 4       # output block (f32 accumulator)
            + 2 * D * tH * 2       # w1 tile (bf16)
            + 2 * tH * tC * 2      # w2 tile (bf16)
            + 2 * 2 * tH * 4       # gamma / beta tiles (f32)
            + 2 * tC * 4           # b2 (f32)
            + 4 * N * tH * 4)      # kernel-body temporaries


def _pick_h_tile(H_pad, N, D, tC):
    # Largest lane-aligned H tile that fits ~80% of the scoped VMEM budget.
    for t in (1024, 512, 256, 128):
        if H_pad % t == 0 and _vmem_est_bytes(N, D, tC, t) <= int(0.8 * _VMEM_LIMIT_BYTES):
            return t
    return 128  # H_pad is always a multiple of 128


@jax.jit
def mlp_forward(x, w1, gamma, beta, w2, b2):
    """Forward of MLP(hidden_count=1) in one pipelined Pallas call.

    x: (N, D) f32; w1: (D, H); gamma/beta: (1, H); w2: (H, C); b2: (1, C).
    """
    N, D = x.shape
    H = w1.shape[1]
    C = w2.shape[1]

    # Lane-dense padding: class dim to a multiple of 128 (unmasked vst), hidden dim
    # to a multiple of 128 (lane-aligned weight tiles, real pipeline for irregular H).
    C_pad = pl.cdiv(C, 128) * 128
    H_pad = pl.cdiv(H, 128) * 128

    x_b = x.astype(jnp.bfloat16)
    w1_p = jnp.zeros((D, H_pad), jnp.bfloat16).at[:, :H].set(w1.astype(jnp.bfloat16))
    g_p = jnp.zeros((1, H_pad), jnp.float32).at[:, :H].set(gamma.astype(jnp.float32))
    bt_p = jnp.zeros((1, H_pad), jnp.float32).at[:, :H].set(beta.astype(jnp.float32))
    w2_p = jnp.zeros((H_pad, C_pad), jnp.bfloat16).at[:H, :C].set(w2.astype(jnp.bfloat16))
    b2_p = jnp.zeros((1, C_pad), jnp.float32).at[:, :C].set(b2.astype(jnp.float32))
    # Padded hidden features: zero w1 columns -> h==0 -> BN(0)*gamma_pad(=0)+beta_pad(=0)
    # -> ReLU -> 0, then zero w2 rows -> contribute exactly 0 to the output.

    # Split the class dim into two output tiles when large enough so the leading
    # "parallel" axis can feed v7x's second TensorCore (matmul1+BN recomputed per half).
    tC = C_pad // 2 if (C_pad >= 256 and (C_pad // 2) % 128 == 0) else C_pad
    nC = C_pad // tC

    tH = _pick_h_tile(H_pad, N, D, tC)
    nH = H_pad // tH

    out_p = pl.pallas_call(
        _mlp_kernel,
        out_shape=jax.ShapeDtypeStruct((N, C_pad), jnp.float32),
        grid_spec=pltpu.PrefetchScalarGridSpec(
            num_scalar_prefetch=0,
            grid=(nC, nH),
            in_specs=[
                pl.BlockSpec((N, D), lambda c, h: (0, 0)),     # x (grid-invariant block)
                pl.BlockSpec((D, tH), lambda c, h: (0, h)),    # w1 tile
                pl.BlockSpec((1, tH), lambda c, h: (0, h)),    # gamma tile
                pl.BlockSpec((1, tH), lambda c, h: (0, h)),    # beta tile
                pl.BlockSpec((tH, tC), lambda c, h: (h, c)),   # w2 tile
                pl.BlockSpec((1, tC), lambda c, h: (0, c)),    # b2 tile
            ],
            out_specs=pl.BlockSpec((N, tC), lambda c, h: (0, c)),
        ),
        # H is the reduction axis of the second matmul (output block is revisited /
        # accumulated across it) -> "arbitrary".  The C split is independent work ->
        # "parallel".  BN needs the full batch in-kernel, so N is never tiled.
        compiler_params=pltpu.CompilerParams(
            dimension_semantics=("parallel", "arbitrary"),
            vmem_limit_bytes=_VMEM_LIMIT_BYTES,
        ),
    )(x_b, w1_p, g_p, bt_p, w2_p, b2_p)

    return out_p[:, :C]


if __name__ == "__main__":
    # Small shapes consistent with the module: batch=8, input_size=32,
    # hidden_size=32, num_classes=16, hidden_count=1.
    N, D, H, C = 8, 32, 32, 16

    key = jax.random.PRNGKey(0)
    x = jax.random.normal(key, (N, D), dtype=jnp.float32)

    # Parameter init matching the PyTorch module defaults:
    # Linear weights -> torch.nn.init.ones_, Linear biases -> zeros_,
    # BatchNorm1d: gamma = 1, beta = 0.
    w1 = jnp.ones((D, H), jnp.float32)       # Linear(D, H).weight.T
    b1 = jnp.zeros((1, H), jnp.float32)      # cancelled by training-mode BN; not fed to kernel
    gamma = jnp.ones((1, H), jnp.float32)
    beta = jnp.zeros((1, H), jnp.float32)
    w2 = jnp.ones((H, C), jnp.float32)       # Linear(H, C).weight.T
    b2 = jnp.zeros((1, C), jnp.float32)

    out = jax.block_until_ready(mlp_forward(x, w1, gamma, beta, w2, b2))

    # Pure-JAX reference of the same forward semantics (b1 included explicitly to
    # show the BN cancellation; same bf16 matmul operands / f32 accumulation).
    h = jnp.dot(x.astype(jnp.bfloat16), w1.astype(jnp.bfloat16),
                preferred_element_type=jnp.float32) + b1
    mu = h.mean(axis=0, keepdims=True)
    var = ((h - mu) ** 2).mean(axis=0, keepdims=True)
    hn = (h - mu) * jax.lax.rsqrt(var + 1e-5) * gamma + beta
    ha = jnp.maximum(hn, 0.0)
    ref = jnp.dot(ha.astype(jnp.bfloat16), w2.astype(jnp.bfloat16),
                  preferred_element_type=jnp.float32) + b2

    assert out.shape == (N, C)
    # Tolerance sized for bf16 MXU operands (one bf16 ulp ~ 0.4-0.8% relative).
    assert jnp.allclose(out, ref, atol=1e-2, rtol=1e-2), (
        f"max abs err = {jnp.max(jnp.abs(out - ref))}")

    # TODO(synk): BatchNorm1d running_mean / running_var (momentum=0.1) buffer
    # updates are module state, not part of the forward output, and are not emitted.
    print("KERNEL_OK")
</pallas_src>

<mosaic_0001>
module attributes {stable_mosaic.version = 11 : i64} {
  func.func @_mlp_kernel(%arg0: i32, %arg1: i32, %arg2: memref<8x32xbf16, #tpu.memory_space<vmem>>, %arg3: memref<32x128xbf16, #tpu.memory_space<vmem>>, %arg4: memref<1x128xf32, #tpu.memory_space<vmem>>, %arg5: memref<1x128xf32, #tpu.memory_space<vmem>>, %arg6: memref<128x128xbf16, #tpu.memory_space<vmem>>, %arg7: memref<1x128xf32, #tpu.memory_space<vmem>>, %arg8: memref<8x128xf32, #tpu.memory_space<vmem>>) attributes {dimension_semantics = [#tpu.dimension_semantics<parallel>, #tpu.dimension_semantics<arbitrary>], iteration_bounds = array<i64: 1, 1>, scalar_prefetch = 0 : i64, scratch_operands = 0 : i64, tpu.core_type = #tpu.core_type<tc>, window_params = [{pipeline_mode = #tpu.pipeline_mode<synchronous>, transform_indices = @transform_0, window_bounds = array<i64: 8, 32>}, {transform_indices = @transform_1, window_bounds = array<i64: 32, 128>}, {transform_indices = @transform_2, window_bounds = array<i64: 1, 128>}, {transform_indices = @transform_3, window_bounds = array<i64: 1, 128>}, {transform_indices = @transform_4, window_bounds = array<i64: 128, 128>}, {transform_indices = @transform_5, window_bounds = array<i64: 1, 128>}, {transform_indices = @transform_6, window_bounds = array<i64: 8, 128>}]} {
    %c0 = arith.constant 0 : index
    %c0_0 = arith.constant 0 : index
    %0 = vector.load %arg2[%c0, %c0_0] : memref<8x32xbf16, #tpu.memory_space<vmem>>, vector<8x32xbf16>
    %c0_1 = arith.constant 0 : index
    %c0_2 = arith.constant 0 : index
    %1 = vector.load %arg3[%c0_1, %c0_2] : memref<32x128xbf16, #tpu.memory_space<vmem>>, vector<32x128xbf16>
    %cst = arith.constant dense<0.000000e+00> : vector<8x128xf32>
    %2 = tpu.matmul %0, %1, %cst {dimension_numbers = #tpu.dot_dimension_numbers<[1], [0], [0], [1], [0, 0, 1, 1], [], []>} : vector<8x32xbf16>, vector<32x128xbf16>, vector<8x128xf32> -> vector<8x128xf32>
    %cst_3 = arith.constant dense<0.000000e+00> : vector<128xf32>
    %3 = vector.multi_reduction <add>, %2, %cst_3 [0] : vector<8x128xf32> to vector<128xf32>
    %4 = vector.shape_cast %3 : vector<128xf32> to vector<1x128xf32>
    %cst_4 = arith.constant 1.250000e-01 : f32
    %5 = vector.broadcast %cst_4 : f32 to vector<1x128xf32>
    %6 = arith.mulf %4, %5 : vector<1x128xf32>
    %7 = vector.broadcast %6 : vector<1x128xf32> to vector<8x128xf32>
    %8 = arith.subf %2, %7 : vector<8x128xf32>
    %9 = arith.mulf %8, %8 : vector<8x128xf32>
    %cst_5 = arith.constant dense<0.000000e+00> : vector<128xf32>
    %10 = vector.multi_reduction <add>, %9, %cst_5 [0] : vector<8x128xf32> to vector<128xf32>
    %11 = vector.shape_cast %10 : vector<128xf32> to vector<1x128xf32>
    %cst_6 = arith.constant 1.250000e-01 : f32
    %12 = vector.broadcast %cst_6 : f32 to vector<1x128xf32>
    %13 = arith.mulf %11, %12 : vector<1x128xf32>
    %c0_7 = arith.constant 0 : index
    %c0_8 = arith.constant 0 : index
    %14 = vector.load %arg4[%c0_7, %c0_8] : memref<1x128xf32, #tpu.memory_space<vmem>>, vector<1x128xf32>
    %cst_9 = arith.constant 9.99999974E-6 : f32
    %15 = vector.broadcast %cst_9 : f32 to vector<1x128xf32>
    %16 = arith.addf %13, %15 : vector<1x128xf32>
    %17 = math.rsqrt %16 : vector<1x128xf32>
    %18 = arith.mulf %14, %17 : vector<1x128xf32>
    %19 = vector.broadcast %18 : vector<1x128xf32> to vector<8x128xf32>
    %20 = arith.mulf %8, %19 : vector<8x128xf32>
    %c0_10 = arith.constant 0 : index
    %c0_11 = arith.constant 0 : index
    %21 = vector.load %arg5[%c0_10, %c0_11] : memref<1x128xf32, #tpu.memory_space<vmem>>, vector<1x128xf32>
    %22 = vector.broadcast %21 : vector<1x128xf32> to vector<8x128xf32>
    %23 = arith.addf %20, %22 : vector<8x128xf32>
    %cst_12 = arith.constant 0.000000e+00 : f32
    %24 = vector.broadcast %cst_12 : f32 to vector<8x128xf32>
    %25 = arith.maximumf %23, %24 : vector<8x128xf32>
    %c0_i32 = arith.constant 0 : i32
    %26 = arith.cmpi eq, %arg1, %c0_i32 : i32
    %27 = arith.extui %26 : i1 to i32
    %c0_i32_13 = arith.constant 0 : i32
    %28 = arith.cmpi ne, %27, %c0_i32_13 : i32
    scf.if %28 {
      %c0_21 = arith.constant 0 : index
      %c0_22 = arith.constant 0 : index
      %35 = vector.load %arg7[%c0_21, %c0_22] : memref<1x128xf32, #tpu.memory_space<vmem>>, vector<1x128xf32>
      %36 = vector.shape_cast %35 : vector<1x128xf32> to vector<1x128xf32>
      %37 = vector.broadcast %36 : vector<1x128xf32> to vector<8x128xf32>
      %c0_23 = arith.constant 0 : index
      %c0_24 = arith.constant 0 : index
      %38 = vector.load %arg8[%c0_23, %c0_24] : memref<8x128xf32, #tpu.memory_space<vmem>>, vector<8x128xf32>
      tpu.vector_store %arg8[%c0_23, %c0_24], %37 {strides = array<i32>} : memref<8x128xf32, #tpu.memory_space<vmem>>, vector<8x128xf32>,
    } else {
    }
    %c0_14 = arith.constant 0 : index
    %c0_15 = arith.constant 0 : index
    %29 = vector.load %arg8[%c0_14, %c0_15] : memref<8x128xf32, #tpu.memory_space<vmem>>, vector<8x128xf32>
    %30 = arith.truncf %25 : vector<8x128xf32> to vector<8x128xbf16>
    %c0_16 = arith.constant 0 : index
    %c0_17 = arith.constant 0 : index
    %31 = vector.load %arg6[%c0_16, %c0_17] : memref<128x128xbf16, #tpu.memory_space<vmem>>, vector<128x128xbf16>
    %cst_18 = arith.constant dense<0.000000e+00> : vector<8x128xf32>
    %32 = tpu.matmul %30, %31, %cst_18 {dimension_numbers = #tpu.dot_dimension_numbers<[1], [0], [0], [1], [0, 0, 1, 1], [], []>} : vector<8x128xbf16>, vector<128x128xbf16>, vector<8x128xf32> -> vector<8x128xf32>
    %33 = arith.addf %29, %32 : vector<8x128xf32>
    %c0_19 = arith.constant 0 : index
    %c0_20 = arith.constant 0 : index
    %34 = vector.load %arg8[%c0_19, %c0_20] : memref<8x128xf32, #tpu.memory_space<vmem>>, vector<8x128xf32>
    tpu.vector_store %arg8[%c0_19, %c0_20], %33 {strides = array<i32>} : memref<8x128xf32, #tpu.memory_space<vmem>>, vector<8x128xf32>,
    return
  }
  func.func @transform_0(%arg0: i32, %arg1: i32) -> (i32, i32) {
    %c0_i32 = arith.constant 0 : i32
    %c0_i32_0 = arith.constant 0 : i32
    %c0_i32_1 = arith.constant 0 : i32
    return %c0_i32, %c0_i32_0 : i32, i32
  }
  func.func @transform_1(%arg0: i32, %arg1: i32) -> (i32, i32) {
    %c0_i32 = arith.constant 0 : i32
    %c0_i32_0 = arith.constant 0 : i32
    return %c0_i32, %arg1 : i32, i32
  }
  func.func @transform_2(%arg0: i32, %arg1: i32) -> (i32, i32) {
    %c0_i32 = arith.constant 0 : i32
    %c0_i32_0 = arith.constant 0 : i32
    return %c0_i32, %arg1 : i32, i32
  }
  func.func @transform_3(%arg0: i32, %arg1: i32) -> (i32, i32) {
    %c0_i32 = arith.constant 0 : i32
    %c0_i32_0 = arith.constant 0 : i32
    return %c0_i32, %arg1 : i32, i32
  }
  func.func @transform_4(%arg0: i32, %arg1: i32) -> (i32, i32) {
    %c0_i32 = arith.constant 0 : i32
    return %arg1, %arg0 : i32, i32
  }
  func.func @transform_5(%arg0: i32, %arg1: i32) -> (i32, i32) {
    %c0_i32 = arith.constant 0 : i32
    %c0_i32_0 = arith.constant 0 : i32
    return %c0_i32, %arg0 : i32, i32
  }
  func.func @transform_6(%arg0: i32, %arg1: i32) -> (i32, i32) {
    %c0_i32 = arith.constant 0 : i32
    %c0_i32_0 = arith.constant 0 : i32
    return %c0_i32, %arg0 : i32, i32
  }
}

</mosaic_0001>

<llo_original>
// kernel: mlp_forward.1
$region0: #{mlp_forward.1}
  #allocation0 [shape = 'u32[]', space=smem, size = 0x4, offset = 0x4, fixed_abs, tag = 'smem constant byte address 0x4 - core index']
  #allocation1 [shape = 'u32[144,128]{1,0:T(1,128)}', space=vmem, size = 0x12000, scoped, tag = 'internal scratch']
  %s0 = inlined_call_operand.vmem [shape: bf16[8,32], index: 0, kind: input, shape index: {}]
  %s1 = inlined_call_operand.vmem [shape: bf16[32,128], index: 1, kind: input, shape index: {}]
  %s2 = inlined_call_operand.vmem [shape: f32[1,128], index: 2, kind: input, shape index: {}]
  %s3 = inlined_call_operand.vmem [shape: f32[1,128], index: 3, kind: input, shape index: {}]
  %s4 = inlined_call_operand.vmem [shape: bf16[128,128], index: 4, kind: input, shape index: {}]
  %s5 = inlined_call_operand.vmem [shape: f32[1,128], index: 5, kind: input, shape index: {}]
  %s6 = inlined_call_operand.hbm [shape: f32[8,128], index: 6, kind: output, shape index: {}]
  %s7 = sld [smem:[#allocation0]]
  $region38: #{mlp_forward.1} parent=0
    _
  %s9 = ssub.s32 1, %s7
  %s10 = scalar_select 0, %s9, %s7
  $region1: #{mlp_forward.1} parent=0
    #allocation2 [shape = 'u8[4096]{0}', space=vmem, size = 0x1000, scoped, tag = 'output window, operand 0, single buffered']
    #allocation3 [shape = 's32[1]{0}', space=sflag, size = 0x4, scoped, tag = 'scoped memory for mlp_forward.1']
    %11 = vsyncpa [#allocation3], 0
    // Predicated region
    $region2: #{mlp_forward.1} parent=1 // pred_check
      _
    $region3: #{mlp_forward.1} parent=1 // pred_check_branch
      %13 = sbr.rel (0) target = $region5
    $region4: #{mlp_forward.1} parent=1 // pred_region
      _
    $region5: #{mlp_forward.1} parent=1 // pred_fallthru
      _
    // Predicated region
    $region6: #{mlp_forward.1} parent=1 // pred_check
      _
    $region7: #{mlp_forward.1} parent=1 // pred_check_branch
      %15 = sbr.rel (0) target = $region9
    $region8: #{mlp_forward.1} parent=1 // pred_region
      _
    $region9: #{mlp_forward.1} parent=1 // pred_fallthru
      _
    // Predicated region
    $region10: #{mlp_forward.1} parent=1 // pred_check
      _
    $region11: #{mlp_forward.1} parent=1 // pred_check_branch
      %17 = sbr.rel (0) target = $region13
    $region12: #{mlp_forward.1} parent=1 // pred_region
      _
    $region13: #{mlp_forward.1} parent=1 // pred_fallthru
      _
    // Predicated region
    $region14: #{mlp_forward.1} parent=1 // pred_check
      _
    $region15: #{mlp_forward.1} parent=1 // pred_check_branch
      %19 = sbr.rel (0) target = $region17
    $region16: #{mlp_forward.1} parent=1 // pred_region
      _
    $region17: #{mlp_forward.1} parent=1 // pred_fallthru
      _
    // Predicated region
    $region18: #{mlp_forward.1} parent=1 // pred_check
      _
    $region19: #{mlp_forward.1} parent=1 // pred_check_branch
      %21 = sbr.rel (0) target = $region21
    $region20: #{mlp_forward.1} parent=1 // pred_region
      _
    $region21: #{mlp_forward.1} parent=1 // pred_fallthru
      _
    // Predicated region
    $region22: #{mlp_forward.1} parent=1 // pred_check
      _
    $region23: #{mlp_forward.1} parent=1 // pred_check_branch
      %23 = sbr.rel (0) target = $region25
    $region24: #{mlp_forward.1} parent=1 // pred_region
      _
    $region25: #{mlp_forward.1} parent=1 // pred_fallthru
      _
    %v25 = vld [vmem:[%s0] sm:$0xf]
    %v26 = vld [vmem:[%s1] sm:$0xf]
    %v27 = vld [vmem:[%s1 + $0x4] sm:$0xf]
    %v28 = vld [vmem:[%s1 + $0x8] sm:$0xf]
    %v29 = vld [vmem:[%s1 + $0xc] sm:$0xf]
    %v34 = vunpack.c.l.b16 %v26
    %v35 = vunpack.c.l.b16 %v27
    %v36 = vunpack.c.l.b16 %v28
    %v37 = vunpack.c.l.b16 %v29
    %v38 = vpack.c.b16 %v35, %v34
    %v39 = vpack.c.b16 %v37, %v36
    %vm42 = vcmask 261120
    %v44 = vsel %vm42, %v25, 0
    %46 = vmatprep.subr.bf16.mxu0 0
    %47 = vmatpush1.bf16.msra.mxu0 0
    %48 = vmatprep.subr.bf16.mxu0 0
    %49 = vmatpush1.bf16.msra.mxu0 0
    %50 = vmatprep.subr.bf16.mxu0 0
    %51 = vmatpush1.bf16.msra.mxu0 0
    %52 = vmatprep.subr.bf16.mxu0 0
    %53 = vmatpush1.bf16.msra.mxu0 0
    %54 = vmatprep.subr.bf16.mxu0 0
    %55 = vmatpush1.bf16.msra.mxu0 0
    %56 = vmatprep.subr.bf16.mxu0 0
    %57 = vmatpush1.bf16.msra.mxu0 0
    %58 = vmatprep.subr.bf16.mxu0 0
    %59 = vmatpush1.bf16.msra.mxu0 %v39
    %60 = vmatprep.subr.bf16.mxu0 0
    %61 = vmatpush1.bf16.msra.mxu0 %v38
    %62 = vmatprep.subr.bf16.mxu0 0
    %63 = vmatpush2.bf16.msra.mxu0 0
    %64 = vmatprep.subr.bf16.mxu0 0
    %65 = vmatpush2.bf16.msra.mxu0 0
    %66 = vmatprep.subr.bf16.mxu0 0
    %67 = vmatpush2.bf16.msra.mxu0 0
    %68 = vmatprep.subr.bf16.mxu0 0
    %69 = vmatpush2.bf16.msra.mxu0 0
    %70 = vmatprep.subr.bf16.mxu0 0
    %71 = vmatpush2.bf16.msra.mxu0 0
    %72 = vmatprep.subr.bf16.mxu0 0
    %73 = vmatpush2.bf16.msra.mxu0 0
    %74 = vmatprep.subr.bf16.mxu0 0
    %75 = vmatpush2.bf16.msra.mxu0 0
    %76 = vmatprep.subr.bf16.mxu0 0
    %77 = vmatpush2.bf16.msra.mxu0 0
    %78 = vmatprep.mubr.bf16.mxu0 0
    %79 = vmatmul.mubr.bf16.gmra.mxu0 %v44
    %v80 = vpop.f32.mrf.mxu0
    %v81 = vadd.f32 0.0, %v80
    %v82 = vpop.f32.mrf.mxu0
    %v83 = vpop.f32.mrf.mxu0
    %v84 = vpop.f32.mrf.mxu0
    %85 = vdwg.mxu0
    %v86 = vrot.slane %v81, 4
    %v87 = vadd.f32 %v81, %v86
    %v88 = vrot.slane %v87, 2
    %v89 = vadd.f32 %v87, %v88
    %v90 = vrot.slane %v89, 1
    %v91 = vadd.f32 %v89, %v90
    %v92 = vmul.f32 %v91, 0.125
    %v93 = vsub.f32 %v81, %v92
    %v94 = vmul.f32 %v93, %v93
    %v95 = vrot.slane %v94, 4
    %v96 = vadd.f32 %v94, %v95
    %v97 = vrot.slane %v96, 2
    %v98 = vadd.f32 %v96, %v97
    %v99 = vrot.slane %v98, 1
    %v100 = vadd.f32 %v98, %v99
    %v101 = vmul.f32 %v100, 0.125
    %v102 = vld [vmem:[%s2] sm:$0x1]
    %v103 = vadd.f32 %v101, 1e-05
    %v104 = vrsqrt.pop %v103
    %v105 = vmul.f32 %v102, %v104
    %v107 = vlaneseq
    %v108 = vshrl.u32 %v107, 7
    %v109 = vsub.s32 0, %v108
    %v110 = vrot.slane %v105, %v109
    %v112 = vmul.f32 %v93, %v110
    %v113 = vld [vmem:[%s3] sm:$0x1]
    %v115 = vlaneseq
    %v116 = vshrl.u32 %v115, 7
    %v117 = vsub.s32 0, %v116
    %v118 = vrot.slane %v113, %v117
    %v120 = vadd.f32 %v112, %v118
    %v121 = vmax.f32 %v120, 0.0
    %p122 = scmp.eq.s32.totalorder 0, 0
    // Predicated region
    $region26: #{mlp_forward.1} parent=1 // pred_check
      %p123 = pneg %p122
    $region27: #{mlp_forward.1} parent=1 // pred_check_branch
      %125 = sbr.rel (%p123) target = $region29
    $region28: #{mlp_forward.1} parent=1 // pred_region
      %v126 = vld [vmem:[%s5] sm:$0x1]
      %v128 = vlaneseq
      %v129 = vshrl.u32 %v128, 7
      %v130 = vsub.s32 0, %v129
      %v131 = vrot.slane %v126, %v130
      %133 = vst [vmem:[#allocation2] sm:$0xff] %v131
    $region29: #{mlp_forward.1} parent=1 // pred_fallthru
      _
    %v134 = vld [vmem:[#allocation2] sm:$0xff]
    %v135 = vpack.c.bf16 %v121, %v121
    %v136 = vld [vmem:[%s4] sm:$0xf]
    %v137 = vld [vmem:[%s4 + $0x4] sm:$0xf]
    %v138 = vld [vmem:[%s4 + $0x8] sm:$0xf]
    %v139 = vld [vmem:[%s4 + $0xc] sm:$0xf]
    %v140 = vld [vmem:[%s4 + $0x10] sm:$0xf]
    %v141 = vld [vmem:[%s4 + $0x14] sm:$0xf]
    %v142 = vld [vmem:[%s4 + $0x18] sm:$0xf]
    %v143 = vld [vmem:[%s4 + $0x1c] sm:$0xf]
    %v144 = vld [vmem:[%s4 + $0x20] sm:$0xf]
    %v145 = vld [vmem:[%s4 + $0x24] sm:$0xf]
    %v146 = vld [vmem:[%s4 + $0x28] sm:$0xf]
    %v147 = vld [vmem:[%s4 + $0x2c] sm:$0xf]
    %v148 = vld [vmem:[%s4 + $0x30] sm:$0xf]
    %v149 = vld [vmem:[%s4 + $0x34] sm:$0xf]
    %v150 = vld [vmem:[%s4 + $0x38] sm:$0xf]
    %v151 = vld [vmem:[%s4 + $0x3c] sm:$0xf]
    %v168 = vunpack.c.l.b16 %v136
    %v169 = vunpack.c.l.b16 %v137
    %v170 = vunpack.c.l.b16 %v138
    %v171 = vunpack.c.l.b16 %v139
    %v172 = vunpack.c.l.b16 %v140
    %v173 = vunpack.c.l.b16 %v141
    %v174 = vunpack.c.l.b16 %v142
    %v175 = vunpack.c.l.b16 %v143
    %v176 = vunpack.c.l.b16 %v144
    %v177 = vunpack.c.l.b16 %v145
    %v178 = vunpack.c.l.b16 %v146
    %v179 = vunpack.c.l.b16 %v147
    %v180 = vunpack.c.l.b16 %v148
    %v181 = vunpack.c.l.b16 %v149
    %v182 = vunpack.c.l.b16 %v150
    %v183 = vunpack.c.l.b16 %v151
    %v184 = vpack.c.b16 %v169, %v168
    %v185 = vpack.c.b16 %v171, %v170
    %v186 = vpack.c.b16 %v173, %v172
    %v187 = vpack.c.b16 %v175, %v174
    %v188 = vpack.c.b16 %v177, %v176
    %v189 = vpack.c.b16 %v179, %v178
    %v190 = vpack.c.b16 %v181, %v180
    %v191 = vpack.c.b16 %v183, %v182
    %200 = vmatprep.subr.bf16.mxu0 0
    %201 = vmatpush1.bf16.msra.mxu0 %v191
    %202 = vmatprep.subr.bf16.mxu0 0
    %203 = vmatpush1.bf16.msra.mxu0 %v190
    %204 = vmatprep.subr.bf16.mxu0 0
    %205 = vmatpush1.bf16.msra.mxu0 %v189
    %206 = vmatprep.subr.bf16.mxu0 0
    %207 = vmatpush1.bf16.msra.mxu0 %v188
    %208 = vmatprep.subr.bf16.mxu0 0
    %209 = vmatpush1.bf16.msra.mxu0 %v187
    %210 = vmatprep.subr.bf16.mxu0 0
    %211 = vmatpush1.bf16.msra.mxu0 %v186
    %212 = vmatprep.subr.bf16.mxu0 0
    %213 = vmatpush1.bf16.msra.mxu0 %v185
    %214 = vmatprep.subr.bf16.mxu0 0
    %215 = vmatpush1.bf16.msra.mxu0 %v184
    %216 = vmatprep.subr.bf16.mxu0 0
    %217 = vmatpush2.bf16.msra.mxu0 0
    %218 = vmatprep.subr.bf16.mxu0 0
    %219 = vmatpush2.bf16.msra.mxu0 0
    %220 = vmatprep.subr.bf16.mxu0 0
    %221 = vmatpush2.bf16.msra.mxu0 0
    %222 = vmatprep.subr.bf16.mxu0 0
    %223 = vmatpush2.bf16.msra.mxu0 0
    %224 = vmatprep.subr.bf16.mxu0 0
    %225 = vmatpush2.bf16.msra.mxu0 0
    %226 = vmatprep.subr.bf16.mxu0 0
    %227 = vmatpush2.bf16.msra.mxu0 0
    %228 = vmatprep.subr.bf16.mxu0 0
    %229 = vmatpush2.bf16.msra.mxu0 0
    %230 = vmatprep.subr.bf16.mxu0 0
    %231 = vmatpush2.bf16.msra.mxu0 0
    %232 = vmatprep.mubr.bf16.mxu0 0
    %233 = vmatmul.mubr.bf16.gmra.mxu0 %v135
    %v234 = vpop.f32.mrf.mxu0
    %v235 = vadd.f32 0.0, %v234
    %v236 = vpop.f32.mrf.mxu0
    %v237 = vpop.f32.mrf.mxu0
    %v238 = vpop.f32.mrf.mxu0
    %239 = vdwg.mxu0
    %v240 = vadd.f32 %v134, %v235
    %241 = vst [vmem:[#allocation2] sm:$0xff] %v240
    // Predicated region
    $region30: #{mlp_forward.1} parent=1 // pred_check
      _
    $region31: #{mlp_forward.1} parent=1 // pred_check_branch
      %243 = sbr.rel (0) target = $region33
    $region32: #{mlp_forward.1} parent=1 // pred_region
      %s245 = ssub.s32 128, 128
      %246 = vsyncadd [#allocation3], %s245
      %s248 = sshll.u32 [#allocation2], 4
      %s249 = int_to_ptr.vmem [resolvable:$true] %s248
      %251 = dma.vmem_to_hbm [thread:$0]  %s249, 128, %s6, [#allocation3]
    $region33: #{mlp_forward.1} parent=1 // pred_fallthru
      _
    // Predicated region
    $region34: #{mlp_forward.1} parent=1 // pred_check
      _
    $region35: #{mlp_forward.1} parent=1 // pred_check_branch
      %253 = sbr.rel (0) target = $region37
    $region36: #{mlp_forward.1} parent=1 // pred_region
      %254 = dma.done [#allocation3], 128
    $region37: #{mlp_forward.1} parent=1 // pred_fallthru
      _
    %255 = vsyncpa [#allocation3], 1

</llo_original>
